<compile_context>
chip_gen: v6e
topology: v6e:2x2x1
jax: 0.10.0
libtpu: 0.0.40
codegen_flags: <defaults>
</compile_context>

<pallas_src>
import jax
import jax.numpy as jnp
from jax.experimental import pallas as pl
from jax.experimental.pallas import tpu as pltpu


def _round_up(x, m):
    return (x + m - 1) // m * m


def _layernorm_kernel(x_ref, w_ref, b_ref, o_ref):
    # x_ref / o_ref: (Bt, C, T) with the spatial tile T on the lane axis.
    # Normalize each spatial column over C (axis=1) == PyTorch LayerNorm(C) on 'b (h w) c'.
    x = x_ref[...].astype(jnp.float32)
    mu = jnp.mean(x, axis=1, keepdims=True)             # (Bt, 1, T)
    xc = x - mu
    var = jnp.mean(xc * xc, axis=1, keepdims=True)      # biased variance (unbiased=False)
    y = xc * jax.lax.rsqrt(var + 1e-5) * w_ref[...] + b_ref[...]   # w/b: (1, C, 1)
    o_ref[...] = y.astype(o_ref.dtype)


def _vmem_targets():
    """Per-generation (target block bytes, vmem_limit_bytes) for this HBM-bound kernel."""
    try:
        kind = jax.devices()[0].device_kind.lower()
    except Exception:  # pragma: no cover
        kind = ""
    if "v5" in kind:
        # ~820 GB/s HBM: 2 MiB blocks already amortize per-step overhead well; just
        # don't fall back to the 16 MiB default scoped VMEM.
        return 2 * 1024 * 1024, 64 * 1024 * 1024
    if "v6" in kind:
        # 128 MiB physical VMEM, ~1.4 TB/s HBM: bigger blocks, generous limit.
        return 4 * 1024 * 1024, 64 * 1024 * 1024
    # v7x (and unknown): only 64 MiB physical VMEM but ~3.2 TB/s HBM -> ~3 MiB blocks,
    # explicit 48 MiB scoped budget (4 pipeline buffers + f32 temps fit comfortably).
    return 3 * 1024 * 1024, 48 * 1024 * 1024


def _block_config(B, C, HW, target_block_bytes):
    """Pick (batch_block, lane_tile): lane-dense, ~target_block_bytes of f32 per block."""
    lanes_full = _round_up(HW, 128)
    # lanes ~ target / (C * 4B), multiple of 128, floor 128, never beyond the spatial extent.
    lanes_cap = max(128, (target_block_bytes // (C * 4)) // 128 * 128)
    lanes = min(lanes_full, lanes_cap)
    bt = 1
    if lanes >= lanes_full:
        # One lane-tile covers the whole spatial extent; block several batch elements
        # per grid step to reach the MiB-scale target (critical for small C / small HW).
        per_batch_bytes = C * lanes * 4
        want = max(1, target_block_bytes // per_batch_bytes)
        for cand in range(min(int(want), B), 0, -1):
            if B % cand == 0:      # keep the batch grid exact (no ragged batch blocks)
                bt = cand
                break
    return bt, lanes


def layer_norm_nchw(x, weight, bias):
    """Equivalent of LayerNorm(dim, 'WithBias').forward(x) with x in NCHW."""
    B, C, H, W = x.shape
    HW = H * W

    # Free (B, C, H*W) view of NCHW; H*W on the lane axis => lane-dense DMA.
    x3 = x.reshape(B, C, HW)
    w3 = weight.astype(jnp.float32).reshape(1, C, 1)
    b3 = bias.astype(jnp.float32).reshape(1, C, 1)

    target_block_bytes, vmem_limit = _vmem_targets()
    bt, lanes = _block_config(B, C, HW, target_block_bytes)

    # VMEM budget guard (matters when very wide C hits the 128-lane floor and the block
    # exceeds the byte target): 2x in + 2x out pipeline buffers + ~3 f32 block temps.
    in_bytes = bt * C * lanes * x.dtype.itemsize
    f32_bytes = bt * C * lanes * 4
    est = 4 * in_bytes + 3 * f32_bytes
    vmem_limit = max(vmem_limit, min(_round_up(est, 1 << 20) + (4 << 20), 60 * 1024 * 1024))

    grid = (B // bt, pl.cdiv(HW, lanes))   # ragged last lane-tile handled by Pallas

    y3 = pl.pallas_call(
        _layernorm_kernel,
        out_shape=jax.ShapeDtypeStruct((B, C, HW), x.dtype),
        grid_spec=pltpu.PrefetchScalarGridSpec(
            num_scalar_prefetch=0,
            grid=grid,
            in_specs=[
                pl.BlockSpec((bt, C, lanes), lambda b, t: (b, 0, t)),
                pl.BlockSpec((1, C, 1), lambda b, t: (0, 0, 0)),  # constant -> fetched once
                pl.BlockSpec((1, C, 1), lambda b, t: (0, 0, 0)),  # constant -> fetched once
            ],
            out_specs=pl.BlockSpec((bt, C, lanes), lambda b, t: (b, 0, t)),
        ),
        compiler_params=pltpu.CompilerParams(
            dimension_semantics=("parallel", "parallel"),
            vmem_limit_bytes=int(vmem_limit),
        ),
    )(x3, w3, b3)

    return y3.reshape(B, C, H, W)


def _reference(x, weight, bias):
    # Same math as the PyTorch module, done directly over the channel axis.
    mu = jnp.mean(x, axis=1, keepdims=True)
    var = jnp.mean((x - mu) ** 2, axis=1, keepdims=True)
    return (x - mu) / jnp.sqrt(var + 1e-5) * weight[None, :, None, None] + bias[None, :, None, None]


if __name__ == "__main__":
    key = jax.random.PRNGKey(0)

    # Parameters exactly as in WithBias_LayerNorm.__init__ (ones / zeros).
    B, C, H, W = 2, 4, 16, 16
    weight = jnp.ones((C,), dtype=jnp.float32)
    bias = jnp.zeros((C,), dtype=jnp.float32)

    x = jax.random.normal(key, (B, C, H, W), dtype=jnp.float32)
    out = jax.block_until_ready(layer_norm_nchw(x, weight, bias))
    ref = _reference(x, weight, bias)
    assert out.shape == (B, C, H, W)
    assert jnp.allclose(out, ref, atol=1e-5, rtol=1e-5)

    # Also exercise the ragged (non-128-divisible H*W) path: masked last-tile writeback,
    # no host-side pad or slice.
    H2, W2 = 10, 7
    x2 = jax.random.normal(jax.random.PRNGKey(1), (B, C, H2, W2), dtype=jnp.float32)
    out2 = jax.block_until_ready(layer_norm_nchw(x2, weight, bias))
    ref2 = _reference(x2, weight, bias)
    assert out2.shape == (B, C, H2, W2)
    assert jnp.allclose(out2, ref2, atol=1e-5, rtol=1e-5)

    print("KERNEL_OK")
</pallas_src>

<mosaic_0001>
module attributes {stable_mosaic.version = 11 : i64} {
  func.func @_layernorm_kernel(%arg0: i32, %arg1: i32, %arg2: memref<2x4x256xf32, #tpu.memory_space<vmem>>, %arg3: memref<1x4x1xf32, #tpu.memory_space<vmem>>, %arg4: memref<1x4x1xf32, #tpu.memory_space<vmem>>, %arg5: memref<2x4x256xf32, #tpu.memory_space<vmem>>) attributes {dimension_semantics = [#tpu.dimension_semantics<parallel>, #tpu.dimension_semantics<parallel>], iteration_bounds = array<i64: 1, 1>, scalar_prefetch = 0 : i64, scratch_operands = 0 : i64, tpu.core_type = #tpu.core_type<tc>, window_params = [{transform_indices = @transform_0, window_bounds = array<i64: 2, 4, 256>}, {pipeline_mode = #tpu.pipeline_mode<synchronous>, transform_indices = @transform_1, window_bounds = array<i64: 1, 4, 1>}, {pipeline_mode = #tpu.pipeline_mode<synchronous>, transform_indices = @transform_2, window_bounds = array<i64: 1, 4, 1>}, {transform_indices = @transform_3, window_bounds = array<i64: 2, 4, 256>}]} {
    %c0 = arith.constant 0 : index
    %c0_0 = arith.constant 0 : index
    %c0_1 = arith.constant 0 : index
    %0 = vector.load %arg2[%c0, %c0_0, %c0_1] : memref<2x4x256xf32, #tpu.memory_space<vmem>>, vector<2x4x256xf32>
    %cst = arith.constant dense<0.000000e+00> : vector<2x256xf32>
    %1 = vector.multi_reduction <add>, %0, %cst [1] : vector<2x4x256xf32> to vector<2x256xf32>
    %2 = vector.shape_cast %1 : vector<2x256xf32> to vector<2x1x256xf32>
    %cst_2 = arith.constant 4.000000e+00 : f32
    %3 = vector.broadcast %cst_2 : f32 to vector<2x1x256xf32>
    %4 = arith.divf %2, %3 : vector<2x1x256xf32>
    %5 = vector.broadcast %4 : vector<2x1x256xf32> to vector<2x4x256xf32>
    %6 = arith.subf %0, %5 : vector<2x4x256xf32>
    %7 = arith.mulf %6, %6 : vector<2x4x256xf32>
    %cst_3 = arith.constant dense<0.000000e+00> : vector<2x256xf32>
    %8 = vector.multi_reduction <add>, %7, %cst_3 [1] : vector<2x4x256xf32> to vector<2x256xf32>
    %9 = vector.shape_cast %8 : vector<2x256xf32> to vector<2x1x256xf32>
    %cst_4 = arith.constant 4.000000e+00 : f32
    %10 = vector.broadcast %cst_4 : f32 to vector<2x1x256xf32>
    %11 = arith.divf %9, %10 : vector<2x1x256xf32>
    %cst_5 = arith.constant 9.99999974E-6 : f32
    %12 = vector.broadcast %cst_5 : f32 to vector<2x1x256xf32>
    %13 = arith.addf %11, %12 : vector<2x1x256xf32>
    %14 = math.rsqrt %13 : vector<2x1x256xf32>
    %15 = vector.broadcast %14 : vector<2x1x256xf32> to vector<2x4x256xf32>
    %16 = arith.mulf %6, %15 : vector<2x4x256xf32>
    %c0_6 = arith.constant 0 : index
    %c0_7 = arith.constant 0 : index
    %c0_8 = arith.constant 0 : index
    %17 = vector.load %arg3[%c0_6, %c0_7, %c0_8] : memref<1x4x1xf32, #tpu.memory_space<vmem>>, vector<1x4x1xf32>
    %18 = vector.broadcast %17 : vector<1x4x1xf32> to vector<2x4x256xf32>
    %19 = arith.mulf %16, %18 : vector<2x4x256xf32>
    %c0_9 = arith.constant 0 : index
    %c0_10 = arith.constant 0 : index
    %c0_11 = arith.constant 0 : index
    %20 = vector.load %arg4[%c0_9, %c0_10, %c0_11] : memref<1x4x1xf32, #tpu.memory_space<vmem>>, vector<1x4x1xf32>
    %21 = vector.broadcast %20 : vector<1x4x1xf32> to vector<2x4x256xf32>
    %22 = arith.addf %19, %21 : vector<2x4x256xf32>
    %c0_12 = arith.constant 0 : index
    %c0_13 = arith.constant 0 : index
    %c0_14 = arith.constant 0 : index
    %23 = vector.load %arg5[%c0_12, %c0_13, %c0_14] : memref<2x4x256xf32, #tpu.memory_space<vmem>>, vector<2x4x256xf32>
    tpu.vector_store %arg5[%c0_12, %c0_13, %c0_14], %22 {strides = array<i32>} : memref<2x4x256xf32, #tpu.memory_space<vmem>>, vector<2x4x256xf32>,
    return
  }
  func.func @transform_0(%arg0: i32, %arg1: i32) -> (i32, i32, i32) {
    %c0_i32 = arith.constant 0 : i32
    %c0_i32_0 = arith.constant 0 : i32
    return %arg0, %c0_i32, %arg1 : i32, i32, i32
  }
  func.func @transform_1(%arg0: i32, %arg1: i32) -> (i32, i32, i32) {
    %c0_i32 = arith.constant 0 : i32
    %c0_i32_0 = arith.constant 0 : i32
    %c0_i32_1 = arith.constant 0 : i32
    %c0_i32_2 = arith.constant 0 : i32
    return %c0_i32, %c0_i32_0, %c0_i32_1 : i32, i32, i32
  }
  func.func @transform_2(%arg0: i32, %arg1: i32) -> (i32, i32, i32) {
    %c0_i32 = arith.constant 0 : i32
    %c0_i32_0 = arith.constant 0 : i32
    %c0_i32_1 = arith.constant 0 : i32
    %c0_i32_2 = arith.constant 0 : i32
    return %c0_i32, %c0_i32_0, %c0_i32_1 : i32, i32, i32
  }
  func.func @transform_3(%arg0: i32, %arg1: i32) -> (i32, i32, i32) {
    %c0_i32 = arith.constant 0 : i32
    %c0_i32_0 = arith.constant 0 : i32
    return %arg0, %c0_i32, %arg1 : i32, i32, i32
  }
}

</mosaic_0001>

<llo_original>
// kernel: tpu_custom_call.1
$region0: #{tpu_custom_call.1}
  #allocation0 [shape = 'u32[]', space=smem, size = 0x4, offset = 0x4, fixed_abs, tag = 'smem constant byte address 0x4 - core index']
  #allocation1 [shape = 'u32[144,128]{1,0:T(1,128)}', space=vmem, size = 0x12000, scoped, tag = 'internal scratch']
  %s0 = inlined_call_operand.hbm [shape: f32[2,4,256], index: 0, kind: input, shape index: {}]
  %s1 = inlined_call_operand.vmem [shape: f32[1,4,1], index: 1, kind: input, shape index: {}]
  %s2 = inlined_call_operand.vmem [shape: f32[1,4,1], index: 2, kind: input, shape index: {}]
  %s3 = inlined_call_operand.hbm [shape: f32[2,4,256], index: 3, kind: output, shape index: {}]
  %s4 = sld [smem:[#allocation0]]
  $region26: #{tpu_custom_call.1} parent=0
    _
  %s6 = ssub.s32 1, %s4
  %s7 = scalar_select 0, %s6, %s4
  $region1: #{tpu_custom_call.1} parent=0
    #allocation2 [shape = 'u8[8192]{0}', space=vmem, size = 0x2000, scoped, tag = 'input window, operand 0, single buffered']
    #allocation3 [shape = 's32[1]{0}', space=sflag, size = 0x4, scoped, tag = 'scoped memory for tpu_custom_call.1']
    #allocation4 [shape = 's32[1]{0}', space=sflag, size = 0x4, scoped, tag = 'scoped memory for tpu_custom_call.1']
    #allocation5 [shape = 'u8[8192]{0}', space=vmem, size = 0x2000, scoped, tag = 'output window, operand 0, single buffered']
    %8 = vsyncpa [#allocation3], 0
    %9 = vsyncpa [#allocation4], 0
    // Predicated region
    $region2: #{tpu_custom_call.1} parent=1 // pred_check
      _
    $region3: #{tpu_custom_call.1} parent=1 // pred_check_branch
      %11 = sbr.rel (0) target = $region5
    $region4: #{tpu_custom_call.1} parent=1 // pred_region
      %s13 = ssub.s32 256, 256
      %14 = vsyncadd [#allocation3], %s13
      %s15 = sshll.u32 [#allocation2], 4
      %s16 = int_to_ptr.vmem [resolvable:$true] %s15
      %21 = dma.hbm_to_vmem [thread:$0]  %s0, 256, %s16, [#allocation3], 128, 128, 8
    $region5: #{tpu_custom_call.1} parent=1 // pred_fallthru
      _
    // Predicated region
    $region6: #{tpu_custom_call.1} parent=1 // pred_check
      _
    $region7: #{tpu_custom_call.1} parent=1 // pred_check_branch
      %23 = sbr.rel (0) target = $region9
    $region8: #{tpu_custom_call.1} parent=1 // pred_region
      _
    $region9: #{tpu_custom_call.1} parent=1 // pred_fallthru
      _
    // Predicated region
    $region10: #{tpu_custom_call.1} parent=1 // pred_check
      _
    $region11: #{tpu_custom_call.1} parent=1 // pred_check_branch
      %25 = sbr.rel (0) target = $region13
    $region12: #{tpu_custom_call.1} parent=1 // pred_region
      _
    $region13: #{tpu_custom_call.1} parent=1 // pred_fallthru
      _
    // Predicated region
    $region14: #{tpu_custom_call.1} parent=1 // pred_check
      _
    $region15: #{tpu_custom_call.1} parent=1 // pred_check_branch
      %27 = sbr.rel (0) target = $region17
    $region16: #{tpu_custom_call.1} parent=1 // pred_region
      %28 = dma.done [#allocation3], 256
    $region17: #{tpu_custom_call.1} parent=1 // pred_fallthru
      _
    %v29 = vld [vmem:[#allocation2] sm:$0xff]
    %v30 = vld [vmem:[#allocation2 + $0x8] sm:$0xff]
    %v33 = vcombine.high %v29, %v29
    %v34 = vcombine.high %v30, %v30
    %vm37 = vcmask 1043456
    %v38 = vsel %vm37, %v29, 0.0
    %v39 = vrot.slane %v38, 4
    %v40 = vadd.f32 %v38, %v39
    %v41 = vrot.slane %v40, 2
    %v42 = vadd.f32 %v40, %v41
    %v43 = vrot.slane %v42, 1
    %v44 = vadd.f32 %v42, %v43
    %v45 = vsel %vm37, %v33, 0.0
    %v46 = vrot.slane %v45, 4
    %v47 = vadd.f32 %v45, %v46
    %v48 = vrot.slane %v47, 2
    %v49 = vadd.f32 %v47, %v48
    %v50 = vrot.slane %v49, 1
    %v51 = vadd.f32 %v49, %v50
    %v52 = vsel %vm37, %v30, 0.0
    %v53 = vrot.slane %v52, 4
    %v54 = vadd.f32 %v52, %v53
    %v55 = vrot.slane %v54, 2
    %v56 = vadd.f32 %v54, %v55
    %v57 = vrot.slane %v56, 1
    %v58 = vadd.f32 %v56, %v57
    %v59 = vsel %vm37, %v34, 0.0
    %v60 = vrot.slane %v59, 4
    %v61 = vadd.f32 %v59, %v60
    %v62 = vrot.slane %v61, 2
    %v63 = vadd.f32 %v61, %v62
    %v64 = vrot.slane %v63, 1
    %v65 = vadd.f32 %v63, %v64
    %v66 = vrcp.pop 4.0
    %v67 = vmul.f32 %v44, %v66
    %v68 = vmul.f32 %v51, %v66
    %v69 = vmul.f32 %v58, %v66
    %v70 = vmul.f32 %v65, %v66
    %v75 = vcombine.low %v67, %v68
    %v76 = vcombine.low %v69, %v70
    %v79 = vsub.f32 %v29, %v75
    %v80 = vsub.f32 %v30, %v76
    %v81 = vmul.f32 %v79, %v79
    %v82 = vmul.f32 %v80, %v80
    %v85 = vcombine.high %v81, %v81
    %v86 = vcombine.high %v82, %v82
    %v89 = vsel %vm37, %v81, 0.0
    %v90 = vrot.slane %v89, 4
    %v91 = vadd.f32 %v89, %v90
    %v92 = vrot.slane %v91, 2
    %v93 = vadd.f32 %v91, %v92
    %v94 = vrot.slane %v93, 1
    %v95 = vadd.f32 %v93, %v94
    %v96 = vsel %vm37, %v85, 0.0
    %v97 = vrot.slane %v96, 4
    %v98 = vadd.f32 %v96, %v97
    %v99 = vrot.slane %v98, 2
    %v100 = vadd.f32 %v98, %v99
    %v101 = vrot.slane %v100, 1
    %v102 = vadd.f32 %v100, %v101
    %v103 = vsel %vm37, %v82, 0.0
    %v104 = vrot.slane %v103, 4
    %v105 = vadd.f32 %v103, %v104
    %v106 = vrot.slane %v105, 2
    %v107 = vadd.f32 %v105, %v106
    %v108 = vrot.slane %v107, 1
    %v109 = vadd.f32 %v107, %v108
    %v110 = vsel %vm37, %v86, 0.0
    %v111 = vrot.slane %v110, 4
    %v112 = vadd.f32 %v110, %v111
    %v113 = vrot.slane %v112, 2
    %v114 = vadd.f32 %v112, %v113
    %v115 = vrot.slane %v114, 1
    %v116 = vadd.f32 %v114, %v115
    %v117 = vmul.f32 %v95, %v66
    %v118 = vmul.f32 %v102, %v66
    %v119 = vmul.f32 %v109, %v66
    %v120 = vmul.f32 %v116, %v66
    %v121 = vadd.f32 %v117, 1e-05
    %v122 = vadd.f32 %v118, 1e-05
    %v123 = vadd.f32 %v119, 1e-05
    %v124 = vadd.f32 %v120, 1e-05
    %v125 = vrsqrt.pop %v121
    %v126 = vrsqrt.pop %v122
    %v127 = vrsqrt.pop %v123
    %v128 = vrsqrt.pop %v124
    %v133 = vcombine.low %v125, %v126
    %v134 = vcombine.low %v127, %v128
    %v137 = vmul.f32 %v79, %v133
    %v138 = vmul.f32 %v80, %v134
    %v139 = vld [vmem:[%s1] sm:$0xf]
    %141 = vset.pattern.permute.xlu0 0
    %142 = vperm.xlu0 %141, %v139
    %v143 = vpop.permute.xlu0 %142
    %v145 = vunpack.c.l.s4 839922192
    %v146 = vunpack.c.0.s8 %v145
    %v147 = vlaneseq
    %v148 = vshrl.u32 %v147, 7
    %v149 = vsub.s32 %v146, %v148
    %v150 = vrot.slane %v143, %v149
    %v152 = vmul.f32 %v137, %v150
    %v153 = vmul.f32 %v138, %v150
    %v154 = vld [vmem:[%s2] sm:$0xf]
    %156 = vset.pattern.permute.xlu0 0
    %157 = vperm.xlu0 %156, %v154
    %v158 = vpop.permute.xlu0 %157
    %v160 = vunpack.c.l.s4 839922192
    %v161 = vunpack.c.0.s8 %v160
    %v162 = vlaneseq
    %v163 = vshrl.u32 %v162, 7
    %v164 = vsub.s32 %v161, %v163
    %v165 = vrot.slane %v158, %v164
    %v167 = vadd.f32 %v152, %v165
    %v168 = vadd.f32 %v153, %v165
    %169 = vst [vmem:[#allocation5] sm:$0xff] %v167
    %170 = vst [vmem:[#allocation5 + $0x8] sm:$0xff] %v168
    // Predicated region
    $region18: #{tpu_custom_call.1} parent=1 // pred_check
      _
    $region19: #{tpu_custom_call.1} parent=1 // pred_check_branch
      %172 = sbr.rel (0) target = $region21
    $region20: #{tpu_custom_call.1} parent=1 // pred_region
      %s174 = ssub.s32 256, 256
      %175 = vsyncadd [#allocation4], %s174
      %s176 = sshll.u32 [#allocation5], 4
      %s177 = int_to_ptr.vmem [resolvable:$true] %s176
      %182 = dma.vmem_to_hbm [thread:$0]  %s177, 256, %s3, [#allocation4], 128, 128, 8
    $region21: #{tpu_custom_call.1} parent=1 // pred_fallthru
      _
    // Predicated region
    $region22: #{tpu_custom_call.1} parent=1 // pred_check
      _
    $region23: #{tpu_custom_call.1} parent=1 // pred_check_branch
      %184 = sbr.rel (0) target = $region25
    $region24: #{tpu_custom_call.1} parent=1 // pred_region
      %185 = dma.done [#allocation4], 256
    $region25: #{tpu_custom_call.1} parent=1 // pred_fallthru
      _
    %186 = vsyncpa [#allocation3], 1
    %187 = vsyncpa [#allocation4], 1

</llo_original>
